<compile_context>
chip_gen: v7x
topology: tpu7x:2x2x1
jax: 0.10.0
libtpu: 0.0.40
codegen_flags: <defaults>
</compile_context>

<pallas_src>
import functools

import jax
import jax.numpy as jnp
import numpy as np
from jax import lax
from jax.experimental import pallas as pl
from jax.experimental.pallas import tpu as pltpu

LN_EPS = 1e-5


def _round_up(n, m):
    return ((n + m - 1) // m) * m


def _layernorm_padded(h, gamma, beta, n_true):
    """LayerNorm over the first n_true lanes of h (lane dim may be zero-padded).

    Padded lanes of h are exactly zero (weight columns / biases / gamma / beta
    are zero-padded), so the raw lane sum already equals the sum over the true
    features; the only mask needed is on the centered values before the
    variance reduction, and it is skipped when there is no padding.
    """
    n_pad = h.shape[-1]
    inv_n = 1.0 / float(n_true)                       # trace-time constant
    mu = jnp.sum(h, axis=-1, keepdims=True) * inv_n
    c = h - mu
    if n_true != n_pad:                               # static, known at trace time
        lane = lax.broadcasted_iota(jnp.int32, (1, n_pad), 1)
        c = jnp.where(lane < n_true, c, 0.0)
    var = jnp.sum(c * c, axis=-1, keepdims=True) * inv_n
    return c * lax.rsqrt(var + LN_EPS) * gamma + beta


def critic_kernel(x_ref, a_ref,
                  w1_ref, b1_ref, g1_ref, be1_ref,
                  w2s_ref, w2a_ref, b2_ref, g2_ref, be2_ref,
                  w3_ref, b3_ref,
                  o_ref, *, hidden1, hidden2):
    # ---- fc1 (bf16 MXU, f32 accumulate) + LayerNorm + ReLU ------------------
    xb = x_ref[...].astype(jnp.bfloat16)
    h1 = jnp.dot(xb, w1_ref[...], preferred_element_type=jnp.float32) + b1_ref[...]
    h1 = _layernorm_padded(h1, g1_ref[...], be1_ref[...], hidden1)
    h1 = jnp.maximum(h1, 0.0)

    # ---- fc2 over cat([h1, a], 1) == h1 @ W2s + a @ W2a ----------------------
    ab = a_ref[...].astype(jnp.bfloat16)
    h2 = (jnp.dot(h1.astype(jnp.bfloat16), w2s_ref[...],
                  preferred_element_type=jnp.float32)
          + jnp.dot(ab, w2a_ref[...], preferred_element_type=jnp.float32)
          + b2_ref[...])
    h2 = _layernorm_padded(h2, g2_ref[...], be2_ref[...], hidden2)
    h2 = jnp.maximum(h2, 0.0)

    # ---- fc3 (single output column): VPU multiply + lane reduction ----------
    o_ref[...] = (jnp.sum(h2 * w3_ref[...], axis=-1, keepdims=True)
                  + b3_ref[...]).astype(o_ref.dtype)


def prepare_params(params, nb_states, nb_actions):
    """One-time weight prep: transpose, split W2, lane-pad hidden dims, cast bf16.

    Only the hidden (output-feature) dims are padded to 128; the tiny
    state/action contraction dims are left exactly as-is.
    """
    hidden1 = params["w1"].shape[0]
    hidden2 = params["w2"].shape[0]
    H1P = _round_up(hidden1, 128)
    H2P = _round_up(hidden2, 128)

    def pad2(m, r, c, dtype):
        out = jnp.zeros((r, c), dtype)
        return out.at[:m.shape[0], :m.shape[1]].set(m.astype(dtype))

    def row(v, n):
        out = jnp.zeros((1, n), jnp.float32)
        return out.at[0, :v.shape[0]].set(v.astype(jnp.float32))

    w1t = params["w1"].T                      # [nb_states, hidden1]
    w2t = params["w2"].T                      # [hidden1 + nb_actions, hidden2]
    w2s = w2t[:hidden1, :]                    # hidden path
    w2a = w2t[hidden1:, :]                    # action path

    return {
        "w1":  pad2(w1t, nb_states, H1P, jnp.bfloat16),   # [S,   H1P]
        "b1":  row(params["b1"], H1P),
        "g1":  row(params["g1"], H1P),
        "be1": row(params["be1"], H1P),
        "w2s": pad2(w2s, H1P, H2P, jnp.bfloat16),         # [H1P, H2P] (zero pad rows)
        "w2a": pad2(w2a, nb_actions, H2P, jnp.bfloat16),  # [A,   H2P]
        "b2":  row(params["b2"], H2P),
        "g2":  row(params["g2"], H2P),
        "be2": row(params["be2"], H2P),
        "w3":  row(params["w3"][0], H2P),                 # [1, H2P] f32 (VPU path)
        "b3":  params["b3"].reshape(1, 1).astype(jnp.float32),
        "hidden1": hidden1,
        "hidden2": hidden2,
        "nb_states": nb_states,
        "nb_actions": nb_actions,
    }


def _pick_vmem_limit():
    """Scoped-VMEM limit gated on the chip: 64 MiB on v5e/v6e (128 MiB physical),
    32 MiB on v7x (64 MiB per TensorCore)."""
    default = 32 * 1024 * 1024
    try:
        cap = int(pltpu.get_tpu_info().vmem_capacity_bytes)
    except Exception:
        return default
    return min(64 * 1024 * 1024, max(default, cap // 2))


def critic_forward(x, a, prepared):
    """x: [B, nb_states], a: [B, nb_actions] -> [B, 1] (f32)."""
    B, S = x.shape
    A = a.shape[1]
    H1P = prepared["w1"].shape[1]
    H2P = prepared["w2s"].shape[1]
    hidden1, hidden2 = prepared["hidden1"], prepared["hidden2"]

    weight_args = (prepared["w1"], prepared["b1"], prepared["g1"], prepared["be1"],
                   prepared["w2s"], prepared["w2a"], prepared["b2"], prepared["g2"],
                   prepared["be2"], prepared["w3"], prepared["b3"])

    # ---- batch-tile selection from a VMEM budget -----------------------------
    vmem_limit = _pick_vmem_limit()
    weight_bytes = sum(int(w.size) * w.dtype.itemsize for w in weight_args)
    # per-row cost: double-buffered f32 activation DMA tiles (x, a, out) +
    # f32 intermediates (h1, h2) + bf16 matmul-input copies.
    per_row = 2 * 4 * (S + A + 1) + 4 * (H1P + H2P) + 2 * (S + A + H1P)
    budget = int(0.6 * vmem_limit) - 2 * weight_bytes   # resident specs 2x-buffered
    tb_cap = max(16, (budget // max(per_row, 1)) // 16 * 16)
    TB_TARGET = min(1024, tb_cap)                       # perf sweep target 512-1024

    if B <= TB_TARGET:
        # Single tile; block == full array, so no batch padding and no wrapper copy.
        ntiles, TB = 1, B
    else:
        ntiles = -(-B // TB_TARGET)
        if ntiles % 2:
            ntiles += 1           # even grid -> balanced across both v7x TensorCores
        TB = _round_up(-(-B // ntiles), 16)
    Bp = ntiles * TB

    if Bp == B:
        xp, ap = x, a             # zero-copy path (common inference case)
    else:
        xp = jnp.zeros((Bp, S), x.dtype).at[:B].set(x)
        ap = jnp.zeros((Bp, A), a.dtype).at[:B].set(a)

    def act(f):
        return pl.BlockSpec((TB, f), lambda i: (i, 0))

    def res(shape):
        return pl.BlockSpec(shape, lambda i: (0, 0))     # same block every step

    kernel = functools.partial(critic_kernel, hidden1=hidden1, hidden2=hidden2)

    out = pl.pallas_call(
        kernel,
        out_shape=jax.ShapeDtypeStruct((Bp, 1), jnp.float32),
        grid=(ntiles,),
        in_specs=[
            act(S), act(A),
            res((S, H1P)), res((1, H1P)), res((1, H1P)), res((1, H1P)),
            res((H1P, H2P)), res((A, H2P)), res((1, H2P)), res((1, H2P)),
            res((1, H2P)),
            res((1, H2P)), res((1, 1)),
        ],
        out_specs=pl.BlockSpec((TB, 1), lambda i: (i, 0)),
        compiler_params=pltpu.CompilerParams(
            dimension_semantics=("parallel",),   # shard batch tiles across TCs
            vmem_limit_bytes=vmem_limit,
        ),
    )(xp, ap, *weight_args)
    return out[:B]


def init_params(key, nb_states, nb_actions, hidden1, hidden2, init_w=0.003):
    """Deterministic init mirroring the PyTorch module's shapes/ranges."""
    ks = jax.random.split(key, 6)
    # fanin_init uses v = 1/sqrt(size[0]) == 1/sqrt(out_features) (quirk kept).
    v1 = 1.0 / np.sqrt(hidden1)
    v2 = 1.0 / np.sqrt(hidden2)
    return {
        "w1": jax.random.uniform(ks[0], (hidden1, nb_states), jnp.float32, -v1, v1),
        "b1": jax.random.uniform(ks[1], (hidden1,), jnp.float32, -v1, v1),
        "w2": jax.random.uniform(ks[2], (hidden2, hidden1 + nb_actions),
                                 jnp.float32, -v2, v2),
        "b2": jax.random.uniform(ks[3], (hidden2,), jnp.float32, -v2, v2),
        "w3": jax.random.uniform(ks[4], (1, hidden2), jnp.float32, -init_w, init_w),
        "b3": jax.random.uniform(ks[5], (1,), jnp.float32, -init_w, init_w),
        # LayerNorm affine params (PyTorch defaults: ones / zeros)
        "g1": jnp.ones((hidden1,), jnp.float32),
        "be1": jnp.zeros((hidden1,), jnp.float32),
        "g2": jnp.ones((hidden2,), jnp.float32),
        "be2": jnp.zeros((hidden2,), jnp.float32),
    }


def critic_reference(x, a, p):
    """Pure-JAX reference (mimics the kernel's bf16 matmul inputs)."""
    bf = jnp.bfloat16

    def ln(h, g, b):
        mu = jnp.mean(h, axis=-1, keepdims=True)
        var = jnp.mean((h - mu) * (h - mu), axis=-1, keepdims=True)
        return (h - mu) * lax.rsqrt(var + LN_EPS) * g + b

    h1 = jnp.dot(x.astype(bf), p["w1"].T.astype(bf),
                 preferred_element_type=jnp.float32) + p["b1"]
    h1 = jnp.maximum(ln(h1, p["g1"], p["be1"]), 0.0)
    cat = jnp.concatenate([h1, a], axis=1)
    h2 = jnp.dot(cat.astype(bf), p["w2"].T.astype(bf),
                 preferred_element_type=jnp.float32) + p["b2"]
    h2 = jnp.maximum(ln(h2, p["g2"], p["be2"]), 0.0)
    return jnp.sum(h2 * p["w3"], axis=-1, keepdims=True) + p["b3"]


if __name__ == "__main__":
    B, nb_states, nb_actions = 2, 16, 8
    hidden1, hidden2 = 32, 32

    key = jax.random.PRNGKey(0)
    kx, ka, kp = jax.random.split(key, 3)
    x = jax.random.normal(kx, (B, nb_states), jnp.float32)
    a = jax.random.normal(ka, (B, nb_actions), jnp.float32)
    params = init_params(kp, nb_states, nb_actions, hidden1, hidden2)

    prepared = prepare_params(params, nb_states, nb_actions)
    out = critic_forward(x, a, prepared)
    out = jax.block_until_ready(out)

    ref = critic_reference(x, a, params)
    assert out.shape == (B, 1)
    np.testing.assert_allclose(np.asarray(out), np.asarray(ref),
                               rtol=1e-2, atol=1e-4)

    print("KERNEL_OK")
</pallas_src>

<mosaic_0001>
module attributes {stable_mosaic.version = 11 : i64} {
  func.func @critic_kernel(%arg0: i32, %arg1: memref<2x16xf32, #tpu.memory_space<vmem>>, %arg2: memref<2x8xf32, #tpu.memory_space<vmem>>, %arg3: memref<16x128xbf16, #tpu.memory_space<vmem>>, %arg4: memref<1x128xf32, #tpu.memory_space<vmem>>, %arg5: memref<1x128xf32, #tpu.memory_space<vmem>>, %arg6: memref<1x128xf32, #tpu.memory_space<vmem>>, %arg7: memref<128x128xbf16, #tpu.memory_space<vmem>>, %arg8: memref<8x128xbf16, #tpu.memory_space<vmem>>, %arg9: memref<1x128xf32, #tpu.memory_space<vmem>>, %arg10: memref<1x128xf32, #tpu.memory_space<vmem>>, %arg11: memref<1x128xf32, #tpu.memory_space<vmem>>, %arg12: memref<1x128xf32, #tpu.memory_space<vmem>>, %arg13: memref<1x1xf32, #tpu.memory_space<vmem>>, %arg14: memref<2x1xf32, #tpu.memory_space<vmem>>) attributes {dimension_semantics = [#tpu.dimension_semantics<parallel>], iteration_bounds = array<i64: 1>, scalar_prefetch = 0 : i64, scratch_operands = 0 : i64, tpu.core_type = #tpu.core_type<tc>, window_params = [{transform_indices = @transform_0, window_bounds = array<i64: 2, 16>}, {transform_indices = @transform_1, window_bounds = array<i64: 2, 8>}, {pipeline_mode = #tpu.pipeline_mode<synchronous>, transform_indices = @transform_2, window_bounds = array<i64: 16, 128>}, {pipeline_mode = #tpu.pipeline_mode<synchronous>, transform_indices = @transform_3, window_bounds = array<i64: 1, 128>}, {pipeline_mode = #tpu.pipeline_mode<synchronous>, transform_indices = @transform_4, window_bounds = array<i64: 1, 128>}, {pipeline_mode = #tpu.pipeline_mode<synchronous>, transform_indices = @transform_5, window_bounds = array<i64: 1, 128>}, {pipeline_mode = #tpu.pipeline_mode<synchronous>, transform_indices = @transform_6, window_bounds = array<i64: 128, 128>}, {pipeline_mode = #tpu.pipeline_mode<synchronous>, transform_indices = @transform_7, window_bounds = array<i64: 8, 128>}, {pipeline_mode = #tpu.pipeline_mode<synchronous>, transform_indices = @transform_8, window_bounds = array<i64: 1, 128>}, {pipeline_mode = #tpu.pipeline_mode<synchronous>, transform_indices = @transform_9, window_bounds = array<i64: 1, 128>}, {pipeline_mode = #tpu.pipeline_mode<synchronous>, transform_indices = @transform_10, window_bounds = array<i64: 1, 128>}, {pipeline_mode = #tpu.pipeline_mode<synchronous>, transform_indices = @transform_11, window_bounds = array<i64: 1, 128>}, {pipeline_mode = #tpu.pipeline_mode<synchronous>, transform_indices = @transform_12, window_bounds = array<i64: 1, 1>}, {transform_indices = @transform_13, window_bounds = array<i64: 2, 1>}]} {
    %c0 = arith.constant 0 : index
    %c0_0 = arith.constant 0 : index
    %0 = vector.load %arg1[%c0, %c0_0] : memref<2x16xf32, #tpu.memory_space<vmem>>, vector<2x16xf32>
    %1 = arith.truncf %0 : vector<2x16xf32> to vector<2x16xbf16>
    %c0_1 = arith.constant 0 : index
    %c0_2 = arith.constant 0 : index
    %2 = vector.load %arg3[%c0_1, %c0_2] : memref<16x128xbf16, #tpu.memory_space<vmem>>, vector<16x128xbf16>
    %cst = arith.constant dense<0.000000e+00> : vector<2x128xf32>
    %3 = tpu.matmul %1, %2, %cst {dimension_numbers = #tpu.dot_dimension_numbers<[1], [0], [0], [1], [0, 0, 1, 1], [], []>} : vector<2x16xbf16>, vector<16x128xbf16>, vector<2x128xf32> -> vector<2x128xf32>
    %c0_3 = arith.constant 0 : index
    %c0_4 = arith.constant 0 : index
    %4 = vector.load %arg4[%c0_3, %c0_4] : memref<1x128xf32, #tpu.memory_space<vmem>>, vector<1x128xf32>
    %5 = vector.broadcast %4 : vector<1x128xf32> to vector<2x128xf32>
    %6 = arith.addf %3, %5 : vector<2x128xf32>
    %c0_5 = arith.constant 0 : index
    %c0_6 = arith.constant 0 : index
    %7 = vector.load %arg5[%c0_5, %c0_6] : memref<1x128xf32, #tpu.memory_space<vmem>>, vector<1x128xf32>
    %c0_7 = arith.constant 0 : index
    %c0_8 = arith.constant 0 : index
    %8 = vector.load %arg6[%c0_7, %c0_8] : memref<1x128xf32, #tpu.memory_space<vmem>>, vector<1x128xf32>
    %cst_9 = arith.constant dense<0.000000e+00> : vector<2xf32>
    %9 = vector.multi_reduction <add>, %6, %cst_9 [1] : vector<2x128xf32> to vector<2xf32>
    %10 = vector.shape_cast %9 : vector<2xf32> to vector<2x1xf32>
    %cst_10 = arith.constant 3.125000e-02 : f32
    %11 = vector.broadcast %cst_10 : f32 to vector<2x1xf32>
    %12 = arith.mulf %10, %11 : vector<2x1xf32>
    %13 = vector.broadcast %12 : vector<2x1xf32> to vector<2x128xf32>
    %14 = arith.subf %6, %13 : vector<2x128xf32>
    %15 = tpu.iota {dimensions = array<i32: 1>} : vector<1x128xi32>
    %c32_i32 = arith.constant 32 : i32
    %16 = vector.broadcast %c32_i32 : i32 to vector<1x128xi32>
    %17 = arith.cmpi slt, %15, %16 : vector<1x128xi32>
    %cst_11 = arith.constant 0.000000e+00 : f32
    %18 = vector.shape_cast %17 : vector<1x128xi1> to vector<1x128xi1>
    %19 = vector.broadcast %18 : vector<1x128xi1> to vector<2x128xi1>
    %20 = vector.broadcast %cst_11 : f32 to vector<2x128xf32>
    %21 = arith.select %19, %14, %20 : vector<2x128xi1>, vector<2x128xf32>
    %22 = arith.mulf %21, %21 : vector<2x128xf32>
    %cst_12 = arith.constant dense<0.000000e+00> : vector<2xf32>
    %23 = vector.multi_reduction <add>, %22, %cst_12 [1] : vector<2x128xf32> to vector<2xf32>
    %24 = vector.shape_cast %23 : vector<2xf32> to vector<2x1xf32>
    %cst_13 = arith.constant 3.125000e-02 : f32
    %25 = vector.broadcast %cst_13 : f32 to vector<2x1xf32>
    %26 = arith.mulf %24, %25 : vector<2x1xf32>
    %cst_14 = arith.constant 9.99999974E-6 : f32
    %27 = vector.broadcast %cst_14 : f32 to vector<2x1xf32>
    %28 = arith.addf %26, %27 : vector<2x1xf32>
    %29 = math.rsqrt %28 : vector<2x1xf32>
    %30 = vector.broadcast %29 : vector<2x1xf32> to vector<2x128xf32>
    %31 = arith.mulf %21, %30 : vector<2x128xf32>
    %32 = vector.broadcast %7 : vector<1x128xf32> to vector<2x128xf32>
    %33 = arith.mulf %31, %32 : vector<2x128xf32>
    %34 = vector.broadcast %8 : vector<1x128xf32> to vector<2x128xf32>
    %35 = arith.addf %33, %34 : vector<2x128xf32>
    %cst_15 = arith.constant 0.000000e+00 : f32
    %36 = vector.broadcast %cst_15 : f32 to vector<2x128xf32>
    %37 = arith.maximumf %35, %36 : vector<2x128xf32>
    %c0_16 = arith.constant 0 : index
    %c0_17 = arith.constant 0 : index
    %38 = vector.load %arg2[%c0_16, %c0_17] : memref<2x8xf32, #tpu.memory_space<vmem>>, vector<2x8xf32>
    %39 = arith.truncf %38 : vector<2x8xf32> to vector<2x8xbf16>
    %40 = arith.truncf %37 : vector<2x128xf32> to vector<2x128xbf16>
    %c0_18 = arith.constant 0 : index
    %c0_19 = arith.constant 0 : index
    %41 = vector.load %arg7[%c0_18, %c0_19] : memref<128x128xbf16, #tpu.memory_space<vmem>>, vector<128x128xbf16>
    %cst_20 = arith.constant dense<0.000000e+00> : vector<2x128xf32>
    %42 = tpu.matmul %40, %41, %cst_20 {dimension_numbers = #tpu.dot_dimension_numbers<[1], [0], [0], [1], [0, 0, 1, 1], [], []>} : vector<2x128xbf16>, vector<128x128xbf16>, vector<2x128xf32> -> vector<2x128xf32>
    %c0_21 = arith.constant 0 : index
    %c0_22 = arith.constant 0 : index
    %43 = vector.load %arg8[%c0_21, %c0_22] : memref<8x128xbf16, #tpu.memory_space<vmem>>, vector<8x128xbf16>
    %cst_23 = arith.constant dense<0.000000e+00> : vector<2x128xf32>
    %44 = tpu.matmul %39, %43, %cst_23 {dimension_numbers = #tpu.dot_dimension_numbers<[1], [0], [0], [1], [0, 0, 1, 1], [], []>} : vector<2x8xbf16>, vector<8x128xbf16>, vector<2x128xf32> -> vector<2x128xf32>
    %45 = arith.addf %42, %44 : vector<2x128xf32>
    %c0_24 = arith.constant 0 : index
    %c0_25 = arith.constant 0 : index
    %46 = vector.load %arg9[%c0_24, %c0_25] : memref<1x128xf32, #tpu.memory_space<vmem>>, vector<1x128xf32>
    %47 = vector.broadcast %46 : vector<1x128xf32> to vector<2x128xf32>
    %48 = arith.addf %45, %47 : vector<2x128xf32>
    %c0_26 = arith.constant 0 : index
    %c0_27 = arith.constant 0 : index
    %49 = vector.load %arg10[%c0_26, %c0_27] : memref<1x128xf32, #tpu.memory_space<vmem>>, vector<1x128xf32>
    %c0_28 = arith.constant 0 : index
    %c0_29 = arith.constant 0 : index
    %50 = vector.load %arg11[%c0_28, %c0_29] : memref<1x128xf32, #tpu.memory_space<vmem>>, vector<1x128xf32>
    %cst_30 = arith.constant dense<0.000000e+00> : vector<2xf32>
    %51 = vector.multi_reduction <add>, %48, %cst_30 [1] : vector<2x128xf32> to vector<2xf32>
    %52 = vector.shape_cast %51 : vector<2xf32> to vector<2x1xf32>
    %cst_31 = arith.constant 3.125000e-02 : f32
    %53 = vector.broadcast %cst_31 : f32 to vector<2x1xf32>
    %54 = arith.mulf %52, %53 : vector<2x1xf32>
    %55 = vector.broadcast %54 : vector<2x1xf32> to vector<2x128xf32>
    %56 = arith.subf %48, %55 : vector<2x128xf32>
    %57 = tpu.iota {dimensions = array<i32: 1>} : vector<1x128xi32>
    %c32_i32_32 = arith.constant 32 : i32
    %58 = vector.broadcast %c32_i32_32 : i32 to vector<1x128xi32>
    %59 = arith.cmpi slt, %57, %58 : vector<1x128xi32>
    %cst_33 = arith.constant 0.000000e+00 : f32
    %60 = vector.shape_cast %59 : vector<1x128xi1> to vector<1x128xi1>
    %61 = vector.broadcast %60 : vector<1x128xi1> to vector<2x128xi1>
    %62 = vector.broadcast %cst_33 : f32 to vector<2x128xf32>
    %63 = arith.select %61, %56, %62 : vector<2x128xi1>, vector<2x128xf32>
    %64 = arith.mulf %63, %63 : vector<2x128xf32>
    %cst_34 = arith.constant dense<0.000000e+00> : vector<2xf32>
    %65 = vector.multi_reduction <add>, %64, %cst_34 [1] : vector<2x128xf32> to vector<2xf32>
    %66 = vector.shape_cast %65 : vector<2xf32> to vector<2x1xf32>
    %cst_35 = arith.constant 3.125000e-02 : f32
    %67 = vector.broadcast %cst_35 : f32 to vector<2x1xf32>
    %68 = arith.mulf %66, %67 : vector<2x1xf32>
    %cst_36 = arith.constant 9.99999974E-6 : f32
    %69 = vector.broadcast %cst_36 : f32 to vector<2x1xf32>
    %70 = arith.addf %68, %69 : vector<2x1xf32>
    %71 = math.rsqrt %70 : vector<2x1xf32>
    %72 = vector.broadcast %71 : vector<2x1xf32> to vector<2x128xf32>
    %73 = arith.mulf %63, %72 : vector<2x128xf32>
    %74 = vector.broadcast %49 : vector<1x128xf32> to vector<2x128xf32>
    %75 = arith.mulf %73, %74 : vector<2x128xf32>
    %76 = vector.broadcast %50 : vector<1x128xf32> to vector<2x128xf32>
    %77 = arith.addf %75, %76 : vector<2x128xf32>
    %cst_37 = arith.constant 0.000000e+00 : f32
    %78 = vector.broadcast %cst_37 : f32 to vector<2x128xf32>
    %79 = arith.maximumf %77, %78 : vector<2x128xf32>
    %c0_38 = arith.constant 0 : index
    %c0_39 = arith.constant 0 : index
    %80 = vector.load %arg12[%c0_38, %c0_39] : memref<1x128xf32, #tpu.memory_space<vmem>>, vector<1x128xf32>
    %81 = vector.broadcast %80 : vector<1x128xf32> to vector<2x128xf32>
    %82 = arith.mulf %79, %81 : vector<2x128xf32>
    %cst_40 = arith.constant dense<0.000000e+00> : vector<2xf32>
    %83 = vector.multi_reduction <add>, %82, %cst_40 [1] : vector<2x128xf32> to vector<2xf32>
    %84 = vector.shape_cast %83 : vector<2xf32> to vector<2x1xf32>
    %c0_41 = arith.constant 0 : index
    %c0_42 = arith.constant 0 : index
    %85 = vector.load %arg13[%c0_41, %c0_42] : memref<1x1xf32, #tpu.memory_space<vmem>>, vector<1x1xf32>
    %86 = vector.broadcast %85 : vector<1x1xf32> to vector<2x1xf32>
    %87 = arith.addf %84, %86 : vector<2x1xf32>
    %c0_43 = arith.constant 0 : index
    %c0_44 = arith.constant 0 : index
    %88 = vector.load %arg14[%c0_43, %c0_44] : memref<2x1xf32, #tpu.memory_space<vmem>>, vector<2x1xf32>
    tpu.vector_store %arg14[%c0_43, %c0_44], %87 {strides = array<i32>} : memref<2x1xf32, #tpu.memory_space<vmem>>, vector<2x1xf32>,
    return
  }
  func.func @transform_0(%arg0: i32) -> (i32, i32) {
    %c0_i32 = arith.constant 0 : i32
    %c0_i32_0 = arith.constant 0 : i32
    return %arg0, %c0_i32 : i32, i32
  }
  func.func @transform_1(%arg0: i32) -> (i32, i32) {
    %c0_i32 = arith.constant 0 : i32
    %c0_i32_0 = arith.constant 0 : i32
    return %arg0, %c0_i32 : i32, i32
  }
  func.func @transform_2(%arg0: i32) -> (i32, i32) {
    %c0_i32 = arith.constant 0 : i32
    %c0_i32_0 = arith.constant 0 : i32
    %c0_i32_1 = arith.constant 0 : i32
    return %c0_i32, %c0_i32_0 : i32, i32
  }
  func.func @transform_3(%arg0: i32) -> (i32, i32) {
    %c0_i32 = arith.constant 0 : i32
    %c0_i32_0 = arith.constant 0 : i32
    %c0_i32_1 = arith.constant 0 : i32
    return %c0_i32, %c0_i32_0 : i32, i32
  }
  func.func @transform_4(%arg0: i32) -> (i32, i32) {
    %c0_i32 = arith.constant 0 : i32
    %c0_i32_0 = arith.constant 0 : i32
    %c0_i32_1 = arith.constant 0 : i32
    return %c0_i32, %c0_i32_0 : i32, i32
  }
  func.func @transform_5(%arg0: i32) -> (i32, i32) {
    %c0_i32 = arith.constant 0 : i32
    %c0_i32_0 = arith.constant 0 : i32
    %c0_i32_1 = arith.constant 0 : i32
    return %c0_i32, %c0_i32_0 : i32, i32
  }
  func.func @transform_6(%arg0: i32) -> (i32, i32) {
    %c0_i32 = arith.constant 0 : i32
    %c0_i32_0 = arith.constant 0 : i32
    %c0_i32_1 = arith.constant 0 : i32
    return %c0_i32, %c0_i32_0 : i32, i32
  }
  func.func @transform_7(%arg0: i32) -> (i32, i32) {
    %c0_i32 = arith.constant 0 : i32
    %c0_i32_0 = arith.constant 0 : i32
    %c0_i32_1 = arith.constant 0 : i32
    return %c0_i32, %c0_i32_0 : i32, i32
  }
  func.func @transform_8(%arg0: i32) -> (i32, i32) {
    %c0_i32 = arith.constant 0 : i32
    %c0_i32_0 = arith.constant 0 : i32
    %c0_i32_1 = arith.constant 0 : i32
    return %c0_i32, %c0_i32_0 : i32, i32
  }
  func.func @transform_9(%arg0: i32) -> (i32, i32) {
    %c0_i32 = arith.constant 0 : i32
    %c0_i32_0 = arith.constant 0 : i32
    %c0_i32_1 = arith.constant 0 : i32
    return %c0_i32, %c0_i32_0 : i32, i32
  }
  func.func @transform_10(%arg0: i32) -> (i32, i32) {
    %c0_i32 = arith.constant 0 : i32
    %c0_i32_0 = arith.constant 0 : i32
    %c0_i32_1 = arith.constant 0 : i32
    return %c0_i32, %c0_i32_0 : i32, i32
  }
  func.func @transform_11(%arg0: i32) -> (i32, i32) {
    %c0_i32 = arith.constant 0 : i32
    %c0_i32_0 = arith.constant 0 : i32
    %c0_i32_1 = arith.constant 0 : i32
    return %c0_i32, %c0_i32_0 : i32, i32
  }
  func.func @transform_12(%arg0: i32) -> (i32, i32) {
    %c0_i32 = arith.constant 0 : i32
    %c0_i32_0 = arith.constant 0 : i32
    %c0_i32_1 = arith.constant 0 : i32
    return %c0_i32, %c0_i32_0 : i32, i32
  }
  func.func @transform_13(%arg0: i32) -> (i32, i32) {
    %c0_i32 = arith.constant 0 : i32
    %c0_i32_0 = arith.constant 0 : i32
    return %arg0, %c0_i32 : i32, i32
  }
}

</mosaic_0001>

<llo_original>
// kernel: tpu_custom_call.1
$region0: #{tpu_custom_call.1}
  #allocation0 [shape = 'u32[]', space=smem, size = 0x4, offset = 0x4, fixed_abs, tag = 'smem constant byte address 0x4 - core index']
  #allocation1 [shape = 'u32[144,128]{1,0:T(1,128)}', space=vmem, size = 0x12000, scoped, tag = 'internal scratch']
  #allocation2 [shape = 'f32[1,1]{1,0:T(1,128)S(1)}', space=vmem, size = 0x200, scoped, tag = 'scoped memory for tpu_custom_call.1']
  %s0 = inlined_call_operand.vmem [shape: f32[2,16], index: 0, kind: input, shape index: {}]
  %s1 = inlined_call_operand.hbm [shape: f32[2,8], index: 1, kind: input, shape index: {}]
  %s2 = inlined_call_operand.vmem [shape: bf16[16,128], index: 2, kind: input, shape index: {}]
  %s3 = inlined_call_operand.vmem [shape: f32[1,128], index: 3, kind: input, shape index: {}]
  %s4 = inlined_call_operand.vmem [shape: f32[1,128], index: 4, kind: input, shape index: {}]
  %s5 = inlined_call_operand.vmem [shape: f32[1,128], index: 5, kind: input, shape index: {}]
  %s6 = inlined_call_operand.hbm [shape: bf16[128,128], index: 6, kind: input, shape index: {}]
  %s7 = inlined_call_operand.vmem [shape: bf16[8,128], index: 7, kind: input, shape index: {}]
  %s8 = inlined_call_operand.vmem [shape: f32[1,128], index: 8, kind: input, shape index: {}]
  %s9 = inlined_call_operand.vmem [shape: f32[1,128], index: 9, kind: input, shape index: {}]
  %s10 = inlined_call_operand.vmem [shape: f32[1,128], index: 10, kind: input, shape index: {}]
  %s11 = inlined_call_operand.vmem [shape: f32[1,128], index: 11, kind: input, shape index: {}]
  %s12 = inlined_call_operand.<no memory space> [shape: f32[1,1], index: 12, kind: input, shape index: {}]
  %s13 = inlined_call_operand.vmem [shape: f32[2,1], index: 13, kind: output, shape index: {}]
  %s14 = sld [smem:[#allocation0]]
  $region70: #{tpu_custom_call.1} parent=0
    _
  %s16 = ssub.s32 1, %s14
  %s17 = scalar_select 0, %s16, %s14
  %v18 = vstv %s12
  %19 = vst [vmem:[#allocation2] sm:$0x1] %v18
  $region1: #{tpu_custom_call.1} parent=0
    #allocation3 [shape = 'u8[1024]{0}', space=vmem, size = 0x400, scoped, tag = 'input window, operand 1, single buffered']
    #allocation4 [shape = 's32[1]{0}', space=sflag, size = 0x4, scoped, tag = 'scoped memory for tpu_custom_call.1']
    #allocation5 [shape = 'u8[32768]{0}', space=vmem, size = 0x8000, scoped, tag = 'input window, operand 6, single buffered']
    #allocation6 [shape = 's32[1]{0}', space=sflag, size = 0x4, scoped, tag = 'scoped memory for tpu_custom_call.1']
    %20 = vsyncpa [#allocation4], 0
    %21 = vsyncpa [#allocation6], 0
    // Predicated region
    $region2: #{tpu_custom_call.1} parent=1 // pred_check
      _
    $region3: #{tpu_custom_call.1} parent=1 // pred_check_branch
      %23 = sbr.rel (0) target = $region5
    $region4: #{tpu_custom_call.1} parent=1 // pred_region
      _
    $region5: #{tpu_custom_call.1} parent=1 // pred_fallthru
      _
    // Predicated region
    $region6: #{tpu_custom_call.1} parent=1 // pred_check
      _
    $region7: #{tpu_custom_call.1} parent=1 // pred_check_branch
      %25 = sbr.rel (0) target = $region9
    $region8: #{tpu_custom_call.1} parent=1 // pred_region
      %s27 = ssub.s32 32, 32
      %28 = vsyncadd [#allocation4], %s27
      %s30 = sshll.u32 [#allocation3], 4
      %s31 = int_to_ptr.vmem [resolvable:$true] %s30
      %33 = dma.hbm_to_vmem [thread:$0]  %s1, 32, %s31, [#allocation4]
    $region9: #{tpu_custom_call.1} parent=1 // pred_fallthru
      _
    // Predicated region
    $region10: #{tpu_custom_call.1} parent=1 // pred_check
      _
    $region11: #{tpu_custom_call.1} parent=1 // pred_check_branch
      %35 = sbr.rel (0) target = $region13
    $region12: #{tpu_custom_call.1} parent=1 // pred_region
      _
    $region13: #{tpu_custom_call.1} parent=1 // pred_fallthru
      _
    // Predicated region
    $region14: #{tpu_custom_call.1} parent=1 // pred_check
      _
    $region15: #{tpu_custom_call.1} parent=1 // pred_check_branch
      %37 = sbr.rel (0) target = $region17
    $region16: #{tpu_custom_call.1} parent=1 // pred_region
      _
    $region17: #{tpu_custom_call.1} parent=1 // pred_fallthru
      _
    // Predicated region
    $region18: #{tpu_custom_call.1} parent=1 // pred_check
      _
    $region19: #{tpu_custom_call.1} parent=1 // pred_check_branch
      %39 = sbr.rel (0) target = $region21
    $region20: #{tpu_custom_call.1} parent=1 // pred_region
      _
    $region21: #{tpu_custom_call.1} parent=1 // pred_fallthru
      _
    // Predicated region
    $region22: #{tpu_custom_call.1} parent=1 // pred_check
      _
    $region23: #{tpu_custom_call.1} parent=1 // pred_check_branch
      %41 = sbr.rel (0) target = $region25
    $region24: #{tpu_custom_call.1} parent=1 // pred_region
      _
    $region25: #{tpu_custom_call.1} parent=1 // pred_fallthru
      _
    // Predicated region
    $region26: #{tpu_custom_call.1} parent=1 // pred_check
      _
    $region27: #{tpu_custom_call.1} parent=1 // pred_check_branch
      %43 = sbr.rel (0) target = $region29
    $region28: #{tpu_custom_call.1} parent=1 // pred_region
      %s45 = ssub.s32 1024, 1024
      %46 = vsyncadd [#allocation6], %s45
      %s47 = sshll.u32 [#allocation5], 4
      %s48 = int_to_ptr.vmem [resolvable:$true] %s47
      %53 = dma.hbm_to_vmem [thread:$0]  %s6, 1024, %s48, [#allocation6], 64, 64, 4
    $region29: #{tpu_custom_call.1} parent=1 // pred_fallthru
      _
    // Predicated region
    $region30: #{tpu_custom_call.1} parent=1 // pred_check
      _
    $region31: #{tpu_custom_call.1} parent=1 // pred_check_branch
      %55 = sbr.rel (0) target = $region33
    $region32: #{tpu_custom_call.1} parent=1 // pred_region
      _
    $region33: #{tpu_custom_call.1} parent=1 // pred_fallthru
      _
    // Predicated region
    $region34: #{tpu_custom_call.1} parent=1 // pred_check
      _
    $region35: #{tpu_custom_call.1} parent=1 // pred_check_branch
      %57 = sbr.rel (0) target = $region37
    $region36: #{tpu_custom_call.1} parent=1 // pred_region
      _
    $region37: #{tpu_custom_call.1} parent=1 // pred_fallthru
      _
    // Predicated region
    $region38: #{tpu_custom_call.1} parent=1 // pred_check
      _
    $region39: #{tpu_custom_call.1} parent=1 // pred_check_branch
      %59 = sbr.rel (0) target = $region41
    $region40: #{tpu_custom_call.1} parent=1 // pred_region
      _
    $region41: #{tpu_custom_call.1} parent=1 // pred_fallthru
      _
    // Predicated region
    $region42: #{tpu_custom_call.1} parent=1 // pred_check
      _
    $region43: #{tpu_custom_call.1} parent=1 // pred_check_branch
      %61 = sbr.rel (0) target = $region45
    $region44: #{tpu_custom_call.1} parent=1 // pred_region
      _
    $region45: #{tpu_custom_call.1} parent=1 // pred_fallthru
      _
    // Predicated region
    $region46: #{tpu_custom_call.1} parent=1 // pred_check
      _
    $region47: #{tpu_custom_call.1} parent=1 // pred_check_branch
      %63 = sbr.rel (0) target = $region49
    $region48: #{tpu_custom_call.1} parent=1 // pred_region
      _
    $region49: #{tpu_custom_call.1} parent=1 // pred_fallthru
      _
    // Predicated region
    $region50: #{tpu_custom_call.1} parent=1 // pred_check
      _
    $region51: #{tpu_custom_call.1} parent=1 // pred_check_branch
      %65 = sbr.rel (0) target = $region53
    $region52: #{tpu_custom_call.1} parent=1 // pred_region
      _
    $region53: #{tpu_custom_call.1} parent=1 // pred_fallthru
      _
    // Predicated region
    $region54: #{tpu_custom_call.1} parent=1 // pred_check
      _
    $region55: #{tpu_custom_call.1} parent=1 // pred_check_branch
      %67 = sbr.rel (0) target = $region57
    $region56: #{tpu_custom_call.1} parent=1 // pred_region
      %68 = dma.done [#allocation4], 32
    $region57: #{tpu_custom_call.1} parent=1 // pred_fallthru
      _
    // Predicated region
    $region58: #{tpu_custom_call.1} parent=1 // pred_check
      _
    $region59: #{tpu_custom_call.1} parent=1 // pred_check_branch
      %70 = sbr.rel (0) target = $region61
    $region60: #{tpu_custom_call.1} parent=1 // pred_region
      %71 = dma.done [#allocation6], 1024
    $region61: #{tpu_custom_call.1} parent=1 // pred_fallthru
      _
    %v73 = vld [vmem:[%s0] sm:$0x3]
    %v74 = vpack.c.bf16 %v73, %v73
    %v75 = vld [vmem:[%s2] sm:$0xf]
    %v76 = vld [vmem:[%s2 + $0x4] sm:$0xf]
    %v77 = vld [vmem:[%s3] sm:$0x1]
    %v79 = vlaneseq
    %v80 = vshrl.u32 %v79, 7
    %v81 = vsub.s32 0, %v80
    %v82 = vrot.slane %v77, %v81
    %v86 = vunpack.c.l.b16 %v75
    %v87 = vunpack.c.l.b16 %v76
    %v88 = vpack.c.b16 %v87, %v86
    %vm90 = vcmask 130048
    %v92 = vsel %vm90, %v74, 0
    %94 = vmatprep.subr.bf16.mxu0 0
    %95 = vmatpush1.bf16.msra.mxu0 %v88
    %96 = vmatprep.subr.bf16.mxu0 0
    %97 = vmatpush1.bf16.msra.mxu0 0
    %98 = vmatprep.subr.bf16.mxu0 0
    %99 = vmatpush1.bf16.msra.mxu0 0
    %100 = vmatprep.subr.bf16.mxu0 0
    %101 = vmatpush1.bf16.msra.mxu0 0
    %102 = vmatprep.subr.bf16.mxu0 0
    %103 = vmatpush1.bf16.msra.mxu0 0
    %104 = vmatprep.subr.bf16.mxu0 0
    %105 = vmatpush1.bf16.msra.mxu0 0
    %106 = vmatprep.subr.bf16.mxu0 0
    %107 = vmatpush1.bf16.msra.mxu0 0
    %108 = vmatprep.subr.bf16.mxu0 0
    %109 = vmatpush1.bf16.msra.mxu0 0
    %110 = vmatprep.subr.bf16.mxu0 0
    %111 = vmatpush1.bf16.msra.mxu0 0
    %112 = vmatprep.subr.bf16.mxu0 0
    %113 = vmatpush1.bf16.msra.mxu0 0
    %114 = vmatprep.subr.bf16.mxu0 0
    %115 = vmatpush1.bf16.msra.mxu0 0
    %116 = vmatprep.subr.bf16.mxu0 0
    %117 = vmatpush1.bf16.msra.mxu0 0
    %118 = vmatprep.subr.bf16.mxu0 0
    %119 = vmatpush1.bf16.msra.mxu0 0
    %120 = vmatprep.subr.bf16.mxu0 0
    %121 = vmatpush1.bf16.msra.mxu0 0
    %122 = vmatprep.subr.bf16.mxu0 0
    %123 = vmatpush1.bf16.msra.mxu0 0
    %124 = vmatprep.subr.bf16.mxu0 0
    %125 = vmatpush1.bf16.msra.mxu0 0
    %126 = vmatprep.mubr.bf16.mxu0 0
    %127 = vmatmul.mubr.bf16.gmra.mrb[0].mxu0 %v92
    %v128 = vpop.f32.mrb[0].mxu0
    %v129 = vadd.f32 %v82, %v128
    %v130 = vpop.f32.mrb[0].mxu0
    %v131 = vpop.f32.mrb[0].mxu0
    %v132 = vpop.f32.mrb[0].mxu0
    %133 = vdwg.mxu0
    %v134 = vld [vmem:[%s4] sm:$0x1]
    %v135 = vld [vmem:[%s5] sm:$0x1]
    %vm136 = vcmask 1041408
    %v137 = vsel %vm136, %v129, 0.0
    %138 = vadd.xlane.f32.xlu0 %v137
    %v139 = vpop.xlane.xlu0 %138
    %v140 = vmul.f32 %v139, 0.03125
    %v141 = vsub.f32 %v129, %v140
    %v142 = vlaneseq
    %v143 = vand.u32 %v142, 127
    %vm144 = vcmp.lt.s32.totalorder %v143, 32
    %v145 = vsel %vm144, 1, 0
    %vm146 = vcmp.eq.s32.totalorder %v145, 1
    %v147 = vsel %vm146, %v141, 0.0
    %v148 = vmul.f32 %v147, %v147
    %v149 = vsel %vm136, %v148, 0.0
    %150 = vadd.xlane.f32.xlu0 %v149
    %v151 = vpop.xlane.xlu0 %150
    %v152 = vmul.f32 %v151, 0.03125
    %v153 = vadd.f32 %v152, 1e-05
    %v154 = vrsqrt.pop %v153
    %v155 = vmul.f32 %v147, %v154
    %v157 = vlaneseq
    %v158 = vshrl.u32 %v157, 7
    %v159 = vsub.s32 0, %v158
    %v160 = vrot.slane %v134, %v159
    %v162 = vmul.f32 %v155, %v160
    %v164 = vlaneseq
    %v165 = vshrl.u32 %v164, 7
    %v166 = vsub.s32 0, %v165
    %v167 = vrot.slane %v135, %v166
    %v169 = vadd.f32 %v162, %v167
    %v170 = vmax.f32 %v169, 0.0
    %v171 = vld [vmem:[#allocation3] sm:$0x3]
    %v172 = vpack.c.bf16 %v171, %v171
    %v173 = vpack.c.bf16 %v170, %v170
    %v174 = vld [vmem:[#allocation5] sm:$0xf]
    %v175 = vld [vmem:[#allocation5 + $0x4] sm:$0xf]
    %v176 = vld [vmem:[#allocation5 + $0x8] sm:$0xf]
    %v177 = vld [vmem:[#allocation5 + $0xc] sm:$0xf]
    %v178 = vld [vmem:[#allocation5 + $0x10] sm:$0xf]
    %v179 = vld [vmem:[#allocation5 + $0x14] sm:$0xf]
    %v180 = vld [vmem:[#allocation5 + $0x18] sm:$0xf]
    %v181 = vld [vmem:[#allocation5 + $0x1c] sm:$0xf]
    %v182 = vld [vmem:[#allocation5 + $0x20] sm:$0xf]
    %v183 = vld [vmem:[#allocation5 + $0x24] sm:$0xf]
    %v184 = vld [vmem:[#allocation5 + $0x28] sm:$0xf]
    %v185 = vld [vmem:[#allocation5 + $0x2c] sm:$0xf]
    %v186 = vld [vmem:[#allocation5 + $0x30] sm:$0xf]
    %v187 = vld [vmem:[#allocation5 + $0x34] sm:$0xf]
    %v188 = vld [vmem:[#allocation5 + $0x38] sm:$0xf]
    %v189 = vld [vmem:[#allocation5 + $0x3c] sm:$0xf]
    %v190 = vld [vmem:[%s7] sm:$0xf]
    %vm191 = vcmask 64512
    %v193 = vsel %vm191, %v172, 0
    %vm195 = vcmask 1043456
    %v197 = vsel %vm195, %v190, 0
    %199 = vmatprep.subr.bf16.mxu0 0
    %200 = vmatpush1.bf16.msra.mxu0 %v197
    %201 = vmatprep.subr.bf16.mxu0 0
    %202 = vmatpush1.bf16.msra.mxu0 0
    %203 = vmatprep.subr.bf16.mxu0 0
    %204 = vmatpush1.bf16.msra.mxu0 0
    %205 = vmatprep.subr.bf16.mxu0 0
    %206 = vmatpush1.bf16.msra.mxu0 0
    %207 = vmatprep.subr.bf16.mxu0 0
    %208 = vmatpush1.bf16.msra.mxu0 0
    %209 = vmatprep.subr.bf16.mxu0 0
    %210 = vmatpush1.bf16.msra.mxu0 0
    %211 = vmatprep.subr.bf16.mxu0 0
    %212 = vmatpush1.bf16.msra.mxu0 0
    %213 = vmatprep.subr.bf16.mxu0 0
    %214 = vmatpush1.bf16.msra.mxu0 0
    %215 = vmatprep.subr.bf16.mxu0 0
    %216 = vmatpush1.bf16.msra.mxu0 0
    %217 = vmatprep.subr.bf16.mxu0 0
    %218 = vmatpush1.bf16.msra.mxu0 0
    %219 = vmatprep.subr.bf16.mxu0 0
    %220 = vmatpush1.bf16.msra.mxu0 0
    %221 = vmatprep.subr.bf16.mxu0 0
    %222 = vmatpush1.bf16.msra.mxu0 0
    %223 = vmatprep.subr.bf16.mxu0 0
    %224 = vmatpush1.bf16.msra.mxu0 0
    %225 = vmatprep.subr.bf16.mxu0 0
    %226 = vmatpush1.bf16.msra.mxu0 0
    %227 = vmatprep.subr.bf16.mxu0 0
    %228 = vmatpush1.bf16.msra.mxu0 0
    %229 = vmatprep.subr.bf16.mxu0 0
    %230 = vmatpush1.bf16.msra.mxu0 0
    %231 = vmatprep.mubr.bf16.mxu0 0
    %232 = vmatmul.mubr.bf16.gmra.mrb[0].mxu0 %v193
    %v233 = vpop.f32.mrb[0].mxu0
    %v234 = vadd.f32 0.0, %v233
    %v235 = vpop.f32.mrb[0].mxu0
    %v236 = vpop.f32.mrb[0].mxu0
    %v237 = vpop.f32.mrb[0].mxu0
    %238 = vdwg.mxu0
    %v255 = vunpack.c.l.b16 %v174
    %v256 = vunpack.c.l.b16 %v175
    %v257 = vunpack.c.l.b16 %v176
    %v258 = vunpack.c.l.b16 %v177
    %v259 = vunpack.c.l.b16 %v178
    %v260 = vunpack.c.l.b16 %v179
    %v261 = vunpack.c.l.b16 %v180
    %v262 = vunpack.c.l.b16 %v181
    %v263 = vunpack.c.l.b16 %v182
    %v264 = vunpack.c.l.b16 %v183
    %v265 = vunpack.c.l.b16 %v184
    %v266 = vunpack.c.l.b16 %v185
    %v267 = vunpack.c.l.b16 %v186
    %v268 = vunpack.c.l.b16 %v187
    %v269 = vunpack.c.l.b16 %v188
    %v270 = vunpack.c.l.b16 %v189
    %v271 = vpack.c.b16 %v256, %v255
    %v272 = vpack.c.b16 %v258, %v257
    %v273 = vpack.c.b16 %v260, %v259
    %v274 = vpack.c.b16 %v262, %v261
    %v275 = vpack.c.b16 %v264, %v263
    %v276 = vpack.c.b16 %v266, %v265
    %v277 = vpack.c.b16 %v268, %v267
    %v278 = vpack.c.b16 %v270, %v269
    %287 = vmatprep.subr.bf16.mxu0 0
    %288 = vmatpush1.bf16.msra.mxu0 %v271
    %289 = vmatprep.subr.bf16.mxu0 0
    %290 = vmatpush1.bf16.msra.mxu0 %v272
    %291 = vmatprep.subr.bf16.mxu0 0
    %292 = vmatpush1.bf16.msra.mxu0 %v273
    %293 = vmatprep.subr.bf16.mxu0 0
    %294 = vmatpush1.bf16.msra.mxu0 %v274
    %295 = vmatprep.subr.bf16.mxu0 0
    %296 = vmatpush1.bf16.msra.mxu0 %v275
    %297 = vmatprep.subr.bf16.mxu0 0
    %298 = vmatpush1.bf16.msra.mxu0 %v276
    %299 = vmatprep.subr.bf16.mxu0 0
    %300 = vmatpush1.bf16.msra.mxu0 %v277
    %301 = vmatprep.subr.bf16.mxu0 0
    %302 = vmatpush1.bf16.msra.mxu0 %v278
    %303 = vmatprep.subr.bf16.mxu0 0
    %304 = vmatpush1.bf16.msra.mxu0 0
    %305 = vmatprep.subr.bf16.mxu0 0
    %306 = vmatpush1.bf16.msra.mxu0 0
    %307 = vmatprep.subr.bf16.mxu0 0
    %308 = vmatpush1.bf16.msra.mxu0 0
    %309 = vmatprep.subr.bf16.mxu0 0
    %310 = vmatpush1.bf16.msra.mxu0 0
    %311 = vmatprep.subr.bf16.mxu0 0
    %312 = vmatpush1.bf16.msra.mxu0 0
    %313 = vmatprep.subr.bf16.mxu0 0
    %314 = vmatpush1.bf16.msra.mxu0 0
    %315 = vmatprep.subr.bf16.mxu0 0
    %316 = vmatpush1.bf16.msra.mxu0 0
    %317 = vmatprep.subr.bf16.mxu0 0
    %318 = vmatpush1.bf16.msra.mxu0 0
    %319 = vmatprep.mubr.bf16.mxu0 0
    %320 = vmatmul.mubr.bf16.gmra.mrb[0].mxu0 %v173
    %v321 = vpop.f32.mrb[0].mxu0
    %v322 = vadd.f32 %v234, %v321
    %v323 = vpop.f32.mrb[0].mxu0
    %v324 = vpop.f32.mrb[0].mxu0
    %v325 = vpop.f32.mrb[0].mxu0
    %326 = vdwg.mxu0
    %v327 = vld [vmem:[%s8] sm:$0x1]
    %v329 = vlaneseq
    %v330 = vshrl.u32 %v329, 7
    %v331 = vsub.s32 0, %v330
    %v332 = vrot.slane %v327, %v331
    %v334 = vadd.f32 %v322, %v332
    %v335 = vld [vmem:[%s9] sm:$0x1]
    %v336 = vld [vmem:[%s10] sm:$0x1]
    %v337 = vsel %vm136, %v334, 0.0
    %338 = vadd.xlane.f32.xlu0 %v337
    %v339 = vpop.xlane.xlu0 %338
    %v340 = vmul.f32 %v339, 0.03125
    %v341 = vsub.f32 %v334, %v340
    %v342 = vsel %vm146, %v341, 0.0
    %v343 = vmul.f32 %v342, %v342
    %v344 = vsel %vm136, %v343, 0.0
    %345 = vadd.xlane.f32.xlu0 %v344
    %v346 = vpop.xlane.xlu0 %345
    %v347 = vmul.f32 %v346, 0.03125
    %v348 = vadd.f32 %v347, 1e-05
    %v349 = vrsqrt.pop %v348
    %v350 = vmul.f32 %v342, %v349
    %v352 = vlaneseq
    %v353 = vshrl.u32 %v352, 7
    %v354 = vsub.s32 0, %v353
    %v355 = vrot.slane %v335, %v354
    %v357 = vmul.f32 %v350, %v355
    %v359 = vlaneseq
    %v360 = vshrl.u32 %v359, 7
    %v361 = vsub.s32 0, %v360
    %v362 = vrot.slane %v336, %v361
    %v364 = vadd.f32 %v357, %v362
    %v365 = vmax.f32 %v364, 0.0
    %v366 = vld [vmem:[%s11] sm:$0x1]
    %v368 = vlaneseq
    %v369 = vshrl.u32 %v368, 7
    %v370 = vsub.s32 0, %v369
    %v371 = vrot.slane %v366, %v370
    %v373 = vmul.f32 %v365, %v371
    %v374 = vsel %vm136, %v373, 0.0
    %375 = vadd.xlane.f32.xlu0 %v374
    %v376 = vpop.xlane.xlu0 %375
    %v377 = vld [vmem:[#allocation2] sm:$0x1]
    %v379 = vlaneseq
    %v380 = vshrl.u32 %v379, 7
    %v381 = vsub.s32 0, %v380
    %v382 = vrot.slane %v377, %v381
    %v384 = vadd.f32 %v376, %v382
    %vm385 = vcmask 1024
    %386 = vst.msk [vmem:[%s13] sm:$0x3] %vm385, %v384
    // Predicated region
    $region62: #{tpu_custom_call.1} parent=1 // pred_check
      _
    $region63: #{tpu_custom_call.1} parent=1 // pred_check_branch
      %388 = sbr.rel (0) target = $region65
    $region64: #{tpu_custom_call.1} parent=1 // pred_region
      _
    $region65: #{tpu_custom_call.1} parent=1 // pred_fallthru
      _
    // Predicated region
    $region66: #{tpu_custom_call.1} parent=1 // pred_check
      _
    $region67: #{tpu_custom_call.1} parent=1 // pred_check_branch
      %390 = sbr.rel (0) target = $region69
    $region68: #{tpu_custom_call.1} parent=1 // pred_region
      _
    $region69: #{tpu_custom_call.1} parent=1 // pred_fallthru
      _
    %391 = vsyncpa [#allocation4], 1
    %392 = vsyncpa [#allocation6], 1

</llo_original>
